<compile_context>
chip_gen: v6e
topology: v6e:2x2x1
jax: 0.10.0
libtpu: 0.0.40
codegen_flags: <defaults>
</compile_context>

<pallas_src>
import functools

import jax
import jax.numpy as jnp
from jax import lax
from jax.experimental import pallas as pl
from jax.experimental.pallas import tpu as pltpu


def _cnn_kernel(x_ref, w_ref, b_ref, o_ref):
    # x_ref: (block_b * l_pad, e_char*k)  im2col patch rows for block_b words
    # w_ref: (e_char*k, e_word)           conv weight, pre-flattened in wrapper
    # b_ref: (1, e_word)                  conv bias
    # o_ref: (block_b, e_word)            max-pooled output slab
    block_b, e_word = o_ref.shape
    l_pad = x_ref.shape[0] // block_b

    # One MXU matmul for the whole block (conv expressed as im2col GEMM).
    y = jnp.dot(x_ref[...], w_ref[...], preferred_element_type=jnp.float32)
    y = jnp.maximum(y + b_ref[...], 0.0)                # bias + ReLU
    # Tile-aligned split (l_pad % 8 == 0), then max-pool over the sublane axis.
    y = y.reshape(block_b, l_pad, e_word)
    o_ref[...] = jnp.max(y, axis=1).astype(o_ref.dtype)


def _pick_block_b(B, l_pad, ck, itemsize):
    """Words per grid step: ~2 MiB per pipelined x buffer, multiple of 8."""
    row_bytes = max(1, l_pad * ck * itemsize)
    target = 2 * 1024 * 1024
    bb = max(8, min(B, target // row_bytes))
    if B >= 16:
        bb = min(bb, -(-B // 2))   # keep >=2 grid blocks so both v7x TCs get work
    bb = max(8, (bb // 8) * 8)
    return int(bb)


@functools.partial(jax.jit, static_argnames=("block_b",))
def cnn_forward(x, w, b, *, block_b=None):
    """x: (B, e_char, m_word), w: (e_word, e_char, k), b: (e_word,) -> (B, e_word, 1)."""
    B, e_char, m_word = x.shape
    e_word, _, k = w.shape
    if m_word < k:
        raise ValueError("CNN requires m_word >= k (l_out >= 1).")
    l_out = m_word - k + 1
    ck = e_char * k
    l_pad = pl.cdiv(l_out, 8) * 8              # pad pool window to sublane multiple

    # im2col in the wrapper: patches[b, t, c*k + j] = x[b, c, t + j]
    idx = jnp.arange(l_out)[:, None] + jnp.arange(k)[None, :]        # (l_out, k)
    patches = x[:, :, idx]                                           # (B, e_char, l_out, k)
    patches = jnp.transpose(patches, (0, 2, 1, 3)).reshape(B, l_out, ck)
    if l_pad != l_out:
        # Replicate the last valid position; duplicates cannot change the max.
        edge = jnp.broadcast_to(patches[:, -1:, :], (B, l_pad - l_out, ck))
        patches = jnp.concatenate([patches, edge], axis=1)           # (B, l_pad, ck)

    if block_b is None:
        block_b = _pick_block_b(B, l_pad, ck, patches.dtype.itemsize)
    grid_b = pl.cdiv(B, block_b)
    b_pad = grid_b * block_b
    if b_pad != B:
        patches = jnp.pad(patches, ((0, b_pad - B), (0, 0), (0, 0)))

    patches2d = patches.reshape(b_pad * l_pad, ck)   # lane-dense patch slab
    w2 = w.reshape(e_word, ck).T                     # (ck, e_word): no lane-dim slices in kernel
    b2 = b.reshape(1, e_word)

    out = pl.pallas_call(
        _cnn_kernel,
        out_shape=jax.ShapeDtypeStruct((b_pad, e_word), x.dtype),
        grid_spec=pltpu.PrefetchScalarGridSpec(
            num_scalar_prefetch=0,
            grid=(grid_b,),
            in_specs=[
                pl.BlockSpec((block_b * l_pad, ck), lambda i: (i, 0)),
                pl.BlockSpec((ck, e_word), lambda i: (0, 0)),
                pl.BlockSpec((1, e_word), lambda i: (0, 0)),
            ],
            out_specs=pl.BlockSpec((block_b, e_word), lambda i: (i, 0)),
        ),
        compiler_params=pltpu.CompilerParams(
            dimension_semantics=("parallel",),
        ),
    )(patches2d, w2, b2)

    # MaxPool1d keeps a trailing spatial dim of size 1 -> (B, e_word, 1)
    return out[:B, :, None]


def _cnn_reference(x, w, b):
    """Pure-JAX reference matching PyTorch Conv1d + ReLU + MaxPool1d."""
    y = lax.conv_general_dilated(
        x, w, window_strides=(1,), padding="VALID",
        dimension_numbers=("NCH", "OIH", "NCH"),
    )
    y = y + b[None, :, None]
    y = jnp.maximum(y, 0.0)
    return jnp.max(y, axis=2, keepdims=True)


if __name__ == "__main__":
    # Small shapes consistent with the module (char-CNN over words).
    e_char, e_word, k, m_word = 8, 16, 5, 21   # l_out = 17 (padded to 24 internally)
    B = 50                                     # effective batch = sentences * words

    key = jax.random.PRNGKey(0)
    kx, kw, kb = jax.random.split(key, 3)

    # Deterministic parameter init (PyTorch Conv1d-style uniform bound).
    bound = 1.0 / jnp.sqrt(jnp.float32(e_char * k))
    w = jax.random.uniform(kw, (e_word, e_char, k), jnp.float32, -bound, bound)
    b = jax.random.uniform(kb, (e_word,), jnp.float32, -bound, bound)

    # Input: (batch, e_char, m_word) — PyTorch Conv1d NCL layout.
    x = jax.random.normal(kx, (B, e_char, m_word), jnp.float32)

    out = cnn_forward(x, w, b)
    jax.block_until_ready(out)

    ref = _cnn_reference(x, w, b)
    assert out.shape == (B, e_word, 1), out.shape
    assert jnp.allclose(out, ref, atol=1e-5, rtol=1e-5), "mismatch vs reference"

    print("KERNEL_OK")
</pallas_src>

<mosaic_0001>
module attributes {stable_mosaic.version = 11 : i64} {
  func.func @_cnn_kernel(%arg0: i32, %arg1: memref<576x40xf32, #tpu.memory_space<vmem>>, %arg2: memref<40x16xf32, #tpu.memory_space<vmem>>, %arg3: memref<1x16xf32, #tpu.memory_space<vmem>>, %arg4: memref<24x16xf32, #tpu.memory_space<vmem>>) attributes {dimension_semantics = [#tpu.dimension_semantics<parallel>], iteration_bounds = array<i64: 3>, scalar_prefetch = 0 : i64, scratch_operands = 0 : i64, tpu.core_type = #tpu.core_type<tc>, window_params = [{transform_indices = @transform_0, window_bounds = array<i64: 576, 40>}, {pipeline_mode = #tpu.pipeline_mode<synchronous>, transform_indices = @transform_1, window_bounds = array<i64: 40, 16>}, {pipeline_mode = #tpu.pipeline_mode<synchronous>, transform_indices = @transform_2, window_bounds = array<i64: 1, 16>}, {transform_indices = @transform_3, window_bounds = array<i64: 24, 16>}]} {
    %c0 = arith.constant 0 : index
    %c0_0 = arith.constant 0 : index
    %0 = vector.load %arg1[%c0, %c0_0] : memref<576x40xf32, #tpu.memory_space<vmem>>, vector<576x40xf32>
    %c0_1 = arith.constant 0 : index
    %c0_2 = arith.constant 0 : index
    %1 = vector.load %arg2[%c0_1, %c0_2] : memref<40x16xf32, #tpu.memory_space<vmem>>, vector<40x16xf32>
    %cst = arith.constant dense<0.000000e+00> : vector<576x16xf32>
    %2 = tpu.matmul %0, %1, %cst {dimension_numbers = #tpu.dot_dimension_numbers<[1], [0], [0], [1], [0, 0, 1, 1], [], []>} : vector<576x40xf32>, vector<40x16xf32>, vector<576x16xf32> -> vector<576x16xf32>
    %c0_3 = arith.constant 0 : index
    %c0_4 = arith.constant 0 : index
    %3 = vector.load %arg3[%c0_3, %c0_4] : memref<1x16xf32, #tpu.memory_space<vmem>>, vector<1x16xf32>
    %4 = vector.broadcast %3 : vector<1x16xf32> to vector<576x16xf32>
    %5 = arith.addf %2, %4 : vector<576x16xf32>
    %cst_5 = arith.constant 0.000000e+00 : f32
    %6 = vector.broadcast %cst_5 : f32 to vector<576x16xf32>
    %7 = arith.maximumf %5, %6 : vector<576x16xf32>
    %8 = vector.shape_cast %7 : vector<576x16xf32> to vector<24x24x16xf32>
    %cst_6 = arith.constant dense<0xFF800000> : vector<24x16xf32>
    %9 = vector.multi_reduction <maximumf>, %8, %cst_6 [1] : vector<24x24x16xf32> to vector<24x16xf32>
    %c0_7 = arith.constant 0 : index
    %c0_8 = arith.constant 0 : index
    %10 = vector.load %arg4[%c0_7, %c0_8] : memref<24x16xf32, #tpu.memory_space<vmem>>, vector<24x16xf32>
    tpu.vector_store %arg4[%c0_7, %c0_8], %9 {strides = array<i32>} : memref<24x16xf32, #tpu.memory_space<vmem>>, vector<24x16xf32>,
    return
  }
  func.func @transform_0(%arg0: i32) -> (i32, i32) {
    %c0_i32 = arith.constant 0 : i32
    %c0_i32_0 = arith.constant 0 : i32
    return %arg0, %c0_i32 : i32, i32
  }
  func.func @transform_1(%arg0: i32) -> (i32, i32) {
    %c0_i32 = arith.constant 0 : i32
    %c0_i32_0 = arith.constant 0 : i32
    %c0_i32_1 = arith.constant 0 : i32
    return %c0_i32, %c0_i32_0 : i32, i32
  }
  func.func @transform_2(%arg0: i32) -> (i32, i32) {
    %c0_i32 = arith.constant 0 : i32
    %c0_i32_0 = arith.constant 0 : i32
    %c0_i32_1 = arith.constant 0 : i32
    return %c0_i32, %c0_i32_0 : i32, i32
  }
  func.func @transform_3(%arg0: i32) -> (i32, i32) {
    %c0_i32 = arith.constant 0 : i32
    %c0_i32_0 = arith.constant 0 : i32
    return %arg0, %c0_i32 : i32, i32
  }
}

</mosaic_0001>

<llo_original>
// kernel: cnn_forward.1
$region0: #{cnn_forward.1}
  #allocation0 [shape = 'u32[]', space=smem, size = 0x4, offset = 0x4, fixed_abs, tag = 'smem constant byte address 0x4 - core index']
  #allocation1 [shape = 'u32[144,128]{1,0:T(1,128)}', space=vmem, size = 0x12000, scoped, tag = 'internal scratch']
  %s0 = inlined_call_operand.vmem [shape: f32[1728,40], index: 0, kind: input, shape index: {}]
  %s1 = inlined_call_operand.vmem [shape: f32[40,16], index: 1, kind: input, shape index: {}]
  %s2 = inlined_call_operand.vmem [shape: f32[1,16], index: 2, kind: input, shape index: {}]
  %s3 = inlined_call_operand.vmem [shape: f32[72,16], index: 3, kind: output, shape index: {}]
  %s4 = sld [smem:[#allocation0]]
  $region45: #{cnn_forward.1} parent=0
    _
  %s6 = ssub.s32 1, %s4
  %s7 = scalar_select 0, %s6, %s4
  loop: start=0, step=1, limit=5
  $region2: #{cnn_forward.1} parent=0 // loop_pre_header
    _
  $region3: #{cnn_forward.1} parent=0 // loop_header
    %s9 = sphi 0, %s13
    %p10 = scmp.ge.s32.totalorder %s9, 5
    %s19 = sphi 0, %s21
    %s22 = sphi 0, %s19
    %s23 = sphi 0, %s22
    %s39 = sphi 0, %s23
    %s43 = sphi 0, %s43
    %s45 = sphi 0, %s43
    %s46 = sphi 0, %s45
    %s60 = sphi 0, %s46
    %s64 = sphi 0, %s64
    %s66 = sphi 0, %s64
    %s67 = sphi 0, %s66
    %s81 = sphi 0, %s67
    %s87 = sphi 0, %s89
    %s90 = sphi 0, %s87
    %s91 = sphi 0, %s90
    %s107 = sphi 0, %s91
  $region4: #{cnn_forward.1} parent=0 // loop_header_branch
    %12 = sbr.rel (%p10) target = $region8
  $region5: #{cnn_forward.1} parent=0 // loop_body
    %s14 = ssub.s32 %s9, 1
    %s15 = ssub.s32 %s9, 2
    %s16 = sadd.s32 %s9, 1
    %s17 = ssub.s32 %s9, %s16
    %p18 = scmp.eq.s32.totalorder %s17, 0
    %s20 = sadd.s32 %s19, 1
    %s21 = scalar_select %p18, %s19, %s20
    %p24 = pneg %p18
    %p25 = scmp.eq.s32.totalorder %s9, 2
    %p26 = por %p24, %p25
    %p27 = scmp.ne.s32.totalorder %s19, %s22
    %p28 = scmp.eq.s32.totalorder %s9, 0
    %p29 = por %p27, %p28
    %p30 = scmp.ne.s32.totalorder %s19, %s22
    %p31 = scmp.eq.s32.totalorder %s14, 2
    %p32 = por %p30, %p31
    %p33 = scmp.ne.s32.totalorder %s22, %s23
    %p34 = scmp.eq.s32.totalorder %s14, 0
    %p35 = por %p33, %p34
    %p36 = scmp.ne.s32.totalorder %s22, %s23
    %p37 = scmp.eq.s32.totalorder %s15, 2
    %p38 = por %p36, %p37
    %p40 = scmp.ne.s32.totalorder %s23, %s39
    %p41 = scmp.eq.s32.totalorder %s15, 0
    %p42 = por %p40, %p41
    %s44 = sadd.s32 %s43, 1
    %p47 = scmp.eq.s32.totalorder %s9, 2
    %p48 = scmp.ne.s32.totalorder %s43, %s45
    %p49 = scmp.eq.s32.totalorder %s9, 0
    %p50 = por %p48, %p49
    %p51 = scmp.ne.s32.totalorder %s43, %s45
    %p52 = scmp.eq.s32.totalorder %s14, 2
    %p53 = por %p51, %p52
    %p54 = scmp.ne.s32.totalorder %s45, %s46
    %p55 = scmp.eq.s32.totalorder %s14, 0
    %p56 = por %p54, %p55
    %p57 = scmp.ne.s32.totalorder %s45, %s46
    %p58 = scmp.eq.s32.totalorder %s15, 2
    %p59 = por %p57, %p58
    %p61 = scmp.ne.s32.totalorder %s46, %s60
    %p62 = scmp.eq.s32.totalorder %s15, 0
    %p63 = por %p61, %p62
    %s65 = sadd.s32 %s64, 1
    %p68 = scmp.eq.s32.totalorder %s9, 2
    %p69 = scmp.ne.s32.totalorder %s64, %s66
    %p70 = scmp.eq.s32.totalorder %s9, 0
    %p71 = por %p69, %p70
    %p72 = scmp.ne.s32.totalorder %s64, %s66
    %p73 = scmp.eq.s32.totalorder %s14, 2
    %p74 = por %p72, %p73
    %p75 = scmp.ne.s32.totalorder %s66, %s67
    %p76 = scmp.eq.s32.totalorder %s14, 0
    %p77 = por %p75, %p76
    %p78 = scmp.ne.s32.totalorder %s66, %s67
    %p79 = scmp.eq.s32.totalorder %s15, 2
    %p80 = por %p78, %p79
    %p82 = scmp.ne.s32.totalorder %s67, %s81
    %p83 = scmp.eq.s32.totalorder %s15, 0
    %p84 = por %p82, %p83
    %s85 = ssub.s32 %s9, %s16
    %p86 = scmp.eq.s32.totalorder %s85, 0
    %s88 = sadd.s32 %s87, 1
    %s89 = scalar_select %p86, %s87, %s88
    %p92 = pneg %p86
    %p93 = scmp.eq.s32.totalorder %s9, 2
    %p94 = por %p92, %p93
    %p95 = scmp.ne.s32.totalorder %s87, %s90
    %p96 = scmp.eq.s32.totalorder %s9, 0
    %p97 = por %p95, %p96
    %p98 = scmp.ne.s32.totalorder %s87, %s90
    %p99 = scmp.eq.s32.totalorder %s14, 2
    %p100 = por %p98, %p99
    %p101 = scmp.ne.s32.totalorder %s90, %s91
    %p102 = scmp.eq.s32.totalorder %s14, 0
    %p103 = por %p101, %p102
    %p104 = scmp.ne.s32.totalorder %s90, %s91
    %p105 = scmp.eq.s32.totalorder %s15, 2
    %p106 = por %p104, %p105
    %p108 = scmp.ne.s32.totalorder %s91, %s107
    %p109 = scmp.eq.s32.totalorder %s15, 0
    %p110 = por %p108, %p109
    %p111 = scmp.le.s32.totalorder 1, %s9
    %p112 = scmp.lt.s32.totalorder %s9, 4
    %p113 = pnand %p111, %p112
    %p114 = pneg %p113
    // Predicated region
    $region9: #{cnn_forward.1} parent=5 // pred_check
      _
    $region10: #{cnn_forward.1} parent=5 // pred_check_branch
      %116 = sbr.rel (%p113) target = $region12
    $region11: #{cnn_forward.1} parent=5 // pred_region
      %s117 = ssub.s32 %s9, 1
      // Predicated region
      $region13: #{cnn_forward.1} parent=11 // pred_check
        %p118 = pneg %p56
      $region14: #{cnn_forward.1} parent=11 // pred_check_branch
        %120 = sbr.rel (%p118) target = $region16
      $region15: #{cnn_forward.1} parent=11 // pred_region
        _
      $region16: #{cnn_forward.1} parent=11 // pred_fallthru
        _
      // Predicated region
      $region17: #{cnn_forward.1} parent=11 // pred_check
        %p121 = pneg %p77
      $region18: #{cnn_forward.1} parent=11 // pred_check_branch
        %123 = sbr.rel (%p121) target = $region20
      $region19: #{cnn_forward.1} parent=11 // pred_region
        _
      $region20: #{cnn_forward.1} parent=11 // pred_fallthru
        _
    $region12: #{cnn_forward.1} parent=5 // pred_fallthru
      _
    %p124 = scmp.lt.s32.totalorder %s9, 3
    // Predicated region
    $region21: #{cnn_forward.1} parent=5 // pred_check
      %p125 = pneg %p124
    $region22: #{cnn_forward.1} parent=5 // pred_check_branch
      %127 = sbr.rel (%p125) target = $region24
    $region23: #{cnn_forward.1} parent=5 // pred_region
      // Predicated region
      $region25: #{cnn_forward.1} parent=23 // pred_check
        %p128 = pneg %p29
      $region26: #{cnn_forward.1} parent=23 // pred_check_branch
        %130 = sbr.rel (%p128) target = $region28
      $region27: #{cnn_forward.1} parent=23 // pred_region
        %s131 = smul.u32 72, %s9
        %p132 = scmp.lt.s32.totalorder %s131, 215
        %s133 = scalar_select %p132, %s131, 215
        %s134 = smul.addr %s133, 8
        %s135 = scalar_lea.vmem %s0, %s134
        %s136 = smul.u32 72, %s9
      $region28: #{cnn_forward.1} parent=23 // pred_fallthru
        _
    $region24: #{cnn_forward.1} parent=5 // pred_fallthru
      _
    %p137 = scmp.le.s32.totalorder 1, %s9
    %p138 = scmp.lt.s32.totalorder %s9, 4
    %p139 = pnand %p137, %p138
    %p140 = pneg %p139
    // Predicated region
    $region29: #{cnn_forward.1} parent=5 // pred_check
      _
    $region30: #{cnn_forward.1} parent=5 // pred_check_branch
      %142 = sbr.rel (%p139) target = $region32
    $region31: #{cnn_forward.1} parent=5 // pred_region
      %s143 = ssub.s32 %s9, 1
      %s144 = smul.u32 72, %s14
      %p145 = scmp.lt.s32.totalorder %s144, 215
      %s146 = scalar_select %p145, %s144, 215
      %s147 = smul.addr %s146, 8
      %s148 = scalar_lea.vmem %s0, %s147
      %p149 = pneg %p35
      %p150 = pneg %p32
      %p151 = pneg %p56
      %p152 = pneg %p53
      %p153 = pneg %p77
      %p154 = pneg %p74
      %p155 = pneg %p103
      %p156 = pneg %p100
      %s157 = smul.u32 3, %s14
      %p158 = scmp.lt.s32.totalorder %s157, 8
      %s159 = scalar_select %p158, %s157, 8
      %s160 = smul.addr %s159, 8
      %s161 = scalar_lea.vmem %s3, %s160
      %s162 = smul.u32 72, %s14
      %p163 = scmp.lt.s32.totalorder %s162, 215
      %s164 = scalar_select %p163, %s162, 215
      %s165 = smul.addr %s164, 8
      %s166 = scalar_lea.vmem %s0, %s165
      %s167 = smul.u32 72, %s14
      %s168 = smul.u32 3, %s14
      %p169 = scmp.lt.s32.totalorder %s168, 8
      %s170 = scalar_select %p169, %s168, 8
      %s171 = smul.addr %s170, 8
      %s172 = scalar_lea.vmem %s3, %s171
      %s173 = smul.u32 3, %s14
      %v174 = vld [vmem:[%s166] sm:$0xff]
      %v175 = vld [vmem:[%s166 + $0x8] sm:$0xff]
      %v176 = vld [vmem:[%s166 + $0x10] sm:$0xff]
      %v177 = vld [vmem:[%s166 + $0x18] sm:$0xff]
      %v178 = vld [vmem:[%s166 + $0x20] sm:$0xff]
      %v179 = vld [vmem:[%s166 + $0x28] sm:$0xff]
      %v180 = vld [vmem:[%s166 + $0x30] sm:$0xff]
      %v181 = vld [vmem:[%s166 + $0x38] sm:$0xff]
      %v182 = vld [vmem:[%s166 + $0x40] sm:$0xff]
      %v183 = vld [vmem:[%s166 + $0x48] sm:$0xff]
      %v184 = vld [vmem:[%s166 + $0x50] sm:$0xff]
      %v185 = vld [vmem:[%s166 + $0x58] sm:$0xff]
      %v186 = vld [vmem:[%s166 + $0x60] sm:$0xff]
      %v187 = vld [vmem:[%s166 + $0x68] sm:$0xff]
      %v188 = vld [vmem:[%s166 + $0x70] sm:$0xff]
      %v189 = vld [vmem:[%s166 + $0x78] sm:$0xff]
      %v190 = vld [vmem:[%s166 + $0x80] sm:$0xff]
      %v191 = vld [vmem:[%s166 + $0x88] sm:$0xff]
      %v192 = vld [vmem:[%s166 + $0x90] sm:$0xff]
      %v193 = vld [vmem:[%s166 + $0x98] sm:$0xff]
      %v194 = vld [vmem:[%s166 + $0xa0] sm:$0xff]
      %v195 = vld [vmem:[%s166 + $0xa8] sm:$0xff]
      %v196 = vld [vmem:[%s166 + $0xb0] sm:$0xff]
      %v197 = vld [vmem:[%s166 + $0xb8] sm:$0xff]
      %v198 = vld [vmem:[%s166 + $0xc0] sm:$0xff]
      %v199 = vld [vmem:[%s166 + $0xc8] sm:$0xff]
      %v200 = vld [vmem:[%s166 + $0xd0] sm:$0xff]
      %v201 = vld [vmem:[%s166 + $0xd8] sm:$0xff]
      %v202 = vld [vmem:[%s166 + $0xe0] sm:$0xff]
      %v203 = vld [vmem:[%s166 + $0xe8] sm:$0xff]
      %v204 = vld [vmem:[%s166 + $0xf0] sm:$0xff]
      %v205 = vld [vmem:[%s166 + $0xf8] sm:$0xff]
      %v206 = vld [vmem:[%s166 + $0x100] sm:$0xff]
      %v207 = vld [vmem:[%s166 + $0x108] sm:$0xff]
      %v208 = vld [vmem:[%s166 + $0x110] sm:$0xff]
      %v209 = vld [vmem:[%s166 + $0x118] sm:$0xff]
      %v210 = vld [vmem:[%s166 + $0x120] sm:$0xff]
      %v211 = vld [vmem:[%s166 + $0x128] sm:$0xff]
      %v212 = vld [vmem:[%s166 + $0x130] sm:$0xff]
      %v213 = vld [vmem:[%s166 + $0x138] sm:$0xff]
      %v214 = vld [vmem:[%s166 + $0x140] sm:$0xff]
      %v215 = vld [vmem:[%s166 + $0x148] sm:$0xff]
      %v216 = vld [vmem:[%s166 + $0x150] sm:$0xff]
      %v217 = vld [vmem:[%s166 + $0x158] sm:$0xff]
      %v218 = vld [vmem:[%s166 + $0x160] sm:$0xff]
      %v219 = vld [vmem:[%s166 + $0x168] sm:$0xff]
      %v220 = vld [vmem:[%s166 + $0x170] sm:$0xff]
      %v221 = vld [vmem:[%s166 + $0x178] sm:$0xff]
      %v222 = vld [vmem:[%s166 + $0x180] sm:$0xff]
      %v223 = vld [vmem:[%s166 + $0x188] sm:$0xff]
      %v224 = vld [vmem:[%s166 + $0x190] sm:$0xff]
      %v225 = vld [vmem:[%s166 + $0x198] sm:$0xff]
      %v226 = vld [vmem:[%s166 + $0x1a0] sm:$0xff]
      %v227 = vld [vmem:[%s166 + $0x1a8] sm:$0xff]
      %v228 = vld [vmem:[%s166 + $0x1b0] sm:$0xff]
      %v229 = vld [vmem:[%s166 + $0x1b8] sm:$0xff]
      %v230 = vld [vmem:[%s166 + $0x1c0] sm:$0xff]
      %v231 = vld [vmem:[%s166 + $0x1c8] sm:$0xff]
      %v232 = vld [vmem:[%s166 + $0x1d0] sm:$0xff]
      %v233 = vld [vmem:[%s166 + $0x1d8] sm:$0xff]
      %v234 = vld [vmem:[%s166 + $0x1e0] sm:$0xff]
      %v235 = vld [vmem:[%s166 + $0x1e8] sm:$0xff]
      %v236 = vld [vmem:[%s166 + $0x1f0] sm:$0xff]
      %v237 = vld [vmem:[%s166 + $0x1f8] sm:$0xff]
      %v238 = vld [vmem:[%s166 + $0x200] sm:$0xff]
      %v239 = vld [vmem:[%s166 + $0x208] sm:$0xff]
      %v240 = vld [vmem:[%s166 + $0x210] sm:$0xff]
      %v241 = vld [vmem:[%s166 + $0x218] sm:$0xff]
      %v242 = vld [vmem:[%s166 + $0x220] sm:$0xff]
      %v243 = vld [vmem:[%s166 + $0x228] sm:$0xff]
      %v244 = vld [vmem:[%s166 + $0x230] sm:$0xff]
      %v245 = vld [vmem:[%s166 + $0x238] sm:$0xff]
      %v246 = vld [vmem:[%s1] sm:$0xff]
      %v247 = vld [vmem:[%s1 + $0x8] sm:$0xff]
      %v248 = vld [vmem:[%s1 + $0x10] sm:$0xff]
      %v249 = vld [vmem:[%s1 + $0x18] sm:$0xff]
      %v250 = vld [vmem:[%s1 + $0x20] sm:$0xff]
      %v251 = vld [vmem:[%s2] sm:$0x1]
      %v253 = vlaneseq
      %v254 = vshrl.u32 %v253, 7
      %v255 = vsub.s32 0, %v254
      %v256 = vrot.slane %v251, %v255
      %vm258 = vcmask 326656
      %v260 = vsel %vm258, %v174, 0
      %v263 = vsel %vm258, %v175, 0
      %v266 = vsel %vm258, %v176, 0
      %v269 = vsel %vm258, %v177, 0
      %v272 = vsel %vm258, %v178, 0
      %v275 = vsel %vm258, %v179, 0
      %v278 = vsel %vm258, %v180, 0
      %v281 = vsel %vm258, %v181, 0
      %v284 = vsel %vm258, %v182, 0
      %v287 = vsel %vm258, %v183, 0
      %v290 = vsel %vm258, %v184, 0
      %v293 = vsel %vm258, %v185, 0
      %v296 = vsel %vm258, %v186, 0
      %v299 = vsel %vm258, %v187, 0
      %v302 = vsel %vm258, %v188, 0
      %v305 = vsel %vm258, %v189, 0
      %v308 = vsel %vm258, %v190, 0
      %v311 = vsel %vm258, %v191, 0
      %v314 = vsel %vm258, %v192, 0
      %v317 = vsel %vm258, %v193, 0
      %v320 = vsel %vm258, %v194, 0
      %v323 = vsel %vm258, %v195, 0
      %v326 = vsel %vm258, %v196, 0
      %v329 = vsel %vm258, %v197, 0
      %v332 = vsel %vm258, %v198, 0
      %v335 = vsel %vm258, %v199, 0
      %v338 = vsel %vm258, %v200, 0
      %v341 = vsel %vm258, %v201, 0
      %v344 = vsel %vm258, %v202, 0
      %v347 = vsel %vm258, %v203, 0
      %v350 = vsel %vm258, %v204, 0
      %v353 = vsel %vm258, %v205, 0
      %v356 = vsel %vm258, %v206, 0
      %v359 = vsel %vm258, %v207, 0
      %v362 = vsel %vm258, %v208, 0
      %v365 = vsel %vm258, %v209, 0
      %v368 = vsel %vm258, %v210, 0
      %v371 = vsel %vm258, %v211, 0
      %v374 = vsel %vm258, %v212, 0
      %v377 = vsel %vm258, %v213, 0
      %v380 = vsel %vm258, %v214, 0
      %v383 = vsel %vm258, %v215, 0
      %v386 = vsel %vm258, %v216, 0
      %v389 = vsel %vm258, %v217, 0
      %v392 = vsel %vm258, %v218, 0
      %v395 = vsel %vm258, %v219, 0
      %v398 = vsel %vm258, %v220, 0
      %v401 = vsel %vm258, %v221, 0
      %v404 = vsel %vm258, %v222, 0
      %v407 = vsel %vm258, %v223, 0
      %v410 = vsel %vm258, %v224, 0
      %v413 = vsel %vm258, %v225, 0
      %v416 = vsel %vm258, %v226, 0
      %v419 = vsel %vm258, %v227, 0
      %v422 = vsel %vm258, %v228, 0
      %v425 = vsel %vm258, %v229, 0
      %v428 = vsel %vm258, %v230, 0
      %v431 = vsel %vm258, %v231, 0
      %v434 = vsel %vm258, %v232, 0
      %v437 = vsel %vm258, %v233, 0
      %v440 = vsel %vm258, %v234, 0
      %v443 = vsel %vm258, %v235, 0
      %v446 = vsel %vm258, %v236, 0
      %v449 = vsel %vm258, %v237, 0
      %v452 = vsel %vm258, %v238, 0
      %v455 = vsel %vm258, %v239, 0
      %v458 = vsel %vm258, %v240, 0
      %v461 = vsel %vm258, %v241, 0
      %v464 = vsel %vm258, %v242, 0
      %v467 = vsel %vm258, %v243, 0
      %v470 = vsel %vm258, %v244, 0
      %v473 = vsel %vm258, %v245, 0
      %475 = vmatprep.subr.mxu0 0.0
      %476 = vmatpush1.msra.mxu0 0.0
      %477 = vmatprep.subr.mxu0 0.0
      %478 = vmatpush1.msra.mxu0 0.0
      %479 = vmatprep.subr.mxu0 0.0
      %480 = vmatpush1.msra.mxu0 0.0
      %481 = vmatprep.subr.mxu0 0.0
      %482 = vmatpush1.msra.mxu0 0.0
      %483 = vmatprep.subr.mxu0 0.0
      %484 = vmatpush1.msra.mxu0 0.0
      %485 = vmatprep.subr.mxu0 0.0
      %486 = vmatpush1.msra.mxu0 0.0
      %487 = vmatprep.subr.mxu0 0.0
      %488 = vmatpush1.msra.mxu0 0.0
      %489 = vmatprep.subr.mxu0 0.0
      %490 = vmatpush1.msra.mxu0 0.0
      %491 = vmatprep.subr.mxu0 0.0
      %492 = vmatpush1.msra.mxu0 0.0
      %493 = vmatprep.subr.mxu0 0.0
      %494 = vmatpush1.msra.mxu0 0.0
      %495 = vmatprep.subr.mxu0 0.0
      %496 = vmatpush1.msra.mxu0 0.0
      %497 = vmatprep.subr.mxu0 0.0
      %498 = vmatpush1.msra.mxu0 %v250
      %499 = vmatprep.subr.mxu0 0.0
      %500 = vmatpush1.msra.mxu0 %v249
      %501 = vmatprep.subr.mxu0 0.0
      %502 = vmatpush1.msra.mxu0 %v248
      %503 = vmatprep.subr.mxu0 0.0
      %504 = vmatpush1.msra.mxu0 %v247
      %505 = vmatprep.subr.mxu0 0.0
      %506 = vmatpush1.msra.mxu0 %v246
      %507 = vmatprep.subr.mxu0 0.0
      %508 = vmatpush2.msra.mxu0 0.0
      %509 = vmatprep.subr.mxu0 0.0
      %510 = vmatpush2.msra.mxu0 0.0
      %511 = vmatprep.subr.mxu0 0.0
      %512 = vmatpush2.msra.mxu0 0.0
      %513 = vmatprep.subr.mxu0 0.0
      %514 = vmatpush2.msra.mxu0 0.0
      %515 = vmatprep.subr.mxu0 0.0
      %516 = vmatpush2.msra.mxu0 0.0
      %517 = vmatprep.subr.mxu0 0.0
      %518 = vmatpush2.msra.mxu0 0.0
      %519 = vmatprep.subr.mxu0 0.0
      %520 = vmatpush2.msra.mxu0 0.0
      %521 = vmatprep.subr.mxu0 0.0
      %522 = vmatpush2.msra.mxu0 0.0
      %523 = vmatprep.subr.mxu0 0.0
      %524 = vmatpush2.msra.mxu0 0.0
      %525 = vmatprep.subr.mxu0 0.0
      %526 = vmatpush2.msra.mxu0 0.0
      %527 = vmatprep.subr.mxu0 0.0
      %528 = vmatpush2.msra.mxu0 0.0
      %529 = vmatprep.subr.mxu0 0.0
      %530 = vmatpush2.msra.mxu0 0.0
      %531 = vmatprep.subr.mxu0 0.0
      %532 = vmatpush2.msra.mxu0 0.0
      %533 = vmatprep.subr.mxu0 0.0
      %534 = vmatpush2.msra.mxu0 0.0
      %535 = vmatprep.subr.mxu0 0.0
      %536 = vmatpush2.msra.mxu0 0.0
      %537 = vmatprep.subr.mxu0 0.0
      %538 = vmatpush2.msra.mxu0 0.0
      %539 = vmatprep.mubr.f32.mxu0 0.0
      %540 = vmatmul.mubr.f32.gmra.mxu0 %v260
      %v541 = vpop.f32.mrf.mxu0
      %v542 = vadd.f32 %v256, %v541
      %v543 = vpop.f32.mrf.mxu0
      %544 = vmatprep.mubr.f32.mxu0 0.0
      %545 = vmatmul.mubr.f32.gmra.mxu0 %v263
      %v546 = vpop.f32.mrf.mxu0
      %v547 = vadd.f32 %v256, %v546
      %v548 = vpop.f32.mrf.mxu0
      %549 = vmatprep.mubr.f32.mxu0 0.0
      %550 = vmatmul.mubr.f32.gmra.mxu0 %v266
      %v551 = vpop.f32.mrf.mxu0
      %v552 = vadd.f32 %v256, %v551
      %v553 = vpop.f32.mrf.mxu0
      %554 = vmatprep.mubr.f32.mxu0 0.0
      %555 = vmatmul.mubr.f32.gmra.mxu0 %v269
      %v556 = vpop.f32.mrf.mxu0
      %v557 = vadd.f32 %v256, %v556
      %v558 = vpop.f32.mrf.mxu0
      %559 = vmatprep.mubr.f32.mxu0 0.0
      %560 = vmatmul.mubr.f32.gmra.mxu0 %v272
      %v561 = vpop.f32.mrf.mxu0
      %v562 = vadd.f32 %v256, %v561
      %v563 = vpop.f32.mrf.mxu0
      %564 = vmatprep.mubr.f32.mxu0 0.0
      %565 = vmatmul.mubr.f32.gmra.mxu0 %v275
      %v566 = vpop.f32.mrf.mxu0
      %v567 = vadd.f32 %v256, %v566
      %v568 = vpop.f32.mrf.mxu0
      %569 = vmatprep.mubr.f32.mxu0 0.0
      %570 = vmatmul.mubr.f32.gmra.mxu0 %v278
      %v571 = vpop.f32.mrf.mxu0
      %v572 = vadd.f32 %v256, %v571
      %v573 = vpop.f32.mrf.mxu0
      %574 = vmatprep.mubr.f32.mxu0 0.0
      %575 = vmatmul.mubr.f32.gmra.mxu0 %v281
      %v576 = vpop.f32.mrf.mxu0
      %v577 = vadd.f32 %v256, %v576
      %v578 = vpop.f32.mrf.mxu0
      %579 = vmatprep.mubr.f32.mxu0 0.0
      %580 = vmatmul.mubr.f32.gmra.mxu0 %v284
      %v581 = vpop.f32.mrf.mxu0
      %v582 = vadd.f32 %v256, %v581
      %v583 = vpop.f32.mrf.mxu0
      %584 = vmatprep.mubr.f32.mxu0 0.0
      %585 = vmatmul.mubr.f32.gmra.mxu0 %v287
      %v586 = vpop.f32.mrf.mxu0
      %v587 = vadd.f32 %v256, %v586
      %v588 = vpop.f32.mrf.mxu0
      %589 = vmatprep.mubr.f32.mxu0 0.0
      %590 = vmatmul.mubr.f32.gmra.mxu0 %v290
      %v591 = vpop.f32.mrf.mxu0
      %v592 = vadd.f32 %v256, %v591
      %v593 = vpop.f32.mrf.mxu0
      %594 = vmatprep.mubr.f32.mxu0 0.0
      %595 = vmatmul.mubr.f32.gmra.mxu0 %v293
      %v596 = vpop.f32.mrf.mxu0
      %v597 = vadd.f32 %v256, %v596
      %v598 = vpop.f32.mrf.mxu0
      %599 = vmatprep.mubr.f32.mxu0 0.0
      %600 = vmatmul.mubr.f32.gmra.mxu0 %v296
      %v601 = vpop.f32.mrf.mxu0
      %v602 = vadd.f32 %v256, %v601
      %v603 = vpop.f32.mrf.mxu0
      %604 = vmatprep.mubr.f32.mxu0 0.0
      %605 = vmatmul.mubr.f32.gmra.mxu0 %v299
      %v606 = vpop.f32.mrf.mxu0
      %v607 = vadd.f32 %v256, %v606
      %v608 = vpop.f32.mrf.mxu0
      %609 = vmatprep.mubr.f32.mxu0 0.0
      %610 = vmatmul.mubr.f32.gmra.mxu0 %v302
      %v611 = vpop.f32.mrf.mxu0
      %v612 = vadd.f32 %v256, %v611
      %v613 = vpop.f32.mrf.mxu0
      %614 = vmatprep.mubr.f32.mxu0 0.0
      %615 = vmatmul.mubr.f32.gmra.mxu0 %v305
      %v616 = vpop.f32.mrf.mxu0
      %v617 = vadd.f32 %v256, %v616
      %v618 = vpop.f32.mrf.mxu0
      %619 = vmatprep.mubr.f32.mxu0 0.0
      %620 = vmatmul.mubr.f32.gmra.mxu0 %v308
      %v621 = vpop.f32.mrf.mxu0
      %v622 = vadd.f32 %v256, %v621
      %v623 = vpop.f32.mrf.mxu0
      %624 = vmatprep.mubr.f32.mxu0 0.0
      %625 = vmatmul.mubr.f32.gmra.mxu0 %v311
      %v626 = vpop.f32.mrf.mxu0
      %v627 = vadd.f32 %v256, %v626
      %v628 = vpop.f32.mrf.mxu0
      %629 = vmatprep.mubr.f32.mxu0 0.0
      %630 = vmatmul.mubr.f32.gmra.mxu0 %v314
      %v631 = vpop.f32.mrf.mxu0
      %v632 = vadd.f32 %v256, %v631
      %v633 = vpop.f32.mrf.mxu0
      %634 = vmatprep.mubr.f32.mxu0 0.0
      %635 = vmatmul.mubr.f32.gmra.mxu0 %v317
      %v636 = vpop.f32.mrf.mxu0
      %v637 = vadd.f32 %v256, %v636
      %v638 = vpop.f32.mrf.mxu0
      %639 = vmatprep.mubr.f32.mxu0 0.0
      %640 = vmatmul.mubr.f32.gmra.mxu0 %v320
      %v641 = vpop.f32.mrf.mxu0
      %v642 = vadd.f32 %v256, %v641
      %v643 = vpop.f32.mrf.mxu0
      %644 = vmatprep.mubr.f32.mxu0 0.0
      %645 = vmatmul.mubr.f32.gmra.mxu0 %v323
      %v646 = vpop.f32.mrf.mxu0
      %v647 = vadd.f32 %v256, %v646
      %v648 = vpop.f32.mrf.mxu0
      %649 = vmatprep.mubr.f32.mxu0 0.0
      %650 = vmatmul.mubr.f32.gmra.mxu0 %v326
      %v651 = vpop.f32.mrf.mxu0
      %v652 = vadd.f32 %v256, %v651
      %v653 = vpop.f32.mrf.mxu0
      %654 = vmatprep.mubr.f32.mxu0 0.0
      %655 = vmatmul.mubr.f32.gmra.mxu0 %v329
      %v656 = vpop.f32.mrf.mxu0
      %v657 = vadd.f32 %v256, %v656
      %v658 = vpop.f32.mrf.mxu0
      %659 = vmatprep.mubr.f32.mxu0 0.0
      %660 = vmatmul.mubr.f32.gmra.mxu0 %v332
      %v661 = vpop.f32.mrf.mxu0
      %v662 = vadd.f32 %v256, %v661
      %v663 = vpop.f32.mrf.mxu0
      %664 = vmatprep.mubr.f32.mxu0 0.0
      %665 = vmatmul.mubr.f32.gmra.mxu0 %v335
      %v666 = vpop.f32.mrf.mxu0
      %v667 = vadd.f32 %v256, %v666
      %v668 = vpop.f32.mrf.mxu0
      %669 = vmatprep.mubr.f32.mxu0 0.0
      %670 = vmatmul.mubr.f32.gmra.mxu0 %v338
      %v671 = vpop.f32.mrf.mxu0
      %v672 = vadd.f32 %v256, %v671
      %v673 = vpop.f32.mrf.mxu0
      %674 = vmatprep.mubr.f32.mxu0 0.0
      %675 = vmatmul.mubr.f32.gmra.mxu0 %v341
      %v676 = vpop.f32.mrf.mxu0
      %v677 = vadd.f32 %v256, %v676
      %v678 = vpop.f32.mrf.mxu0
      %679 = vmatprep.mubr.f32.mxu0 0.0
      %680 = vmatmul.mubr.f32.gmra.mxu0 %v344
      %v681 = vpop.f32.mrf.mxu0
      %v682 = vadd.f32 %v256, %v681
      %v683 = vpop.f32.mrf.mxu0
      %684 = vmatprep.mubr.f32.mxu0 0.0
      %685 = vmatmul.mubr.f32.gmra.mxu0 %v347
      %v686 = vpop.f32.mrf.mxu0
      %v687 = vadd.f32 %v256, %v686
      %v688 = vpop.f32.mrf.mxu0
      %689 = vmatprep.mubr.f32.mxu0 0.0
      %690 = vmatmul.mubr.f32.gmra.mxu0 %v350
      %v691 = vpop.f32.mrf.mxu0
      %v692 = vadd.f32 %v256, %v691
      %v693 = vpop.f32.mrf.mxu0
      %694 = vmatprep.mubr.f32.mxu0 0.0
      %695 = vmatmul.mubr.f32.gmra.mxu0 %v353
      %v696 = vpop.f32.mrf.mxu0
      %v697 = vadd.f32 %v256, %v696
      %v698 = vpop.f32.mrf.mxu0
      %699 = vmatprep.mubr.f32.mxu0 0.0
      %700 = vmatmul.mubr.f32.gmra.mxu0 %v356
      %v701 = vpop.f32.mrf.mxu0
      %v702 = vadd.f32 %v256, %v701
      %v703 = vpop.f32.mrf.mxu0
      %704 = vmatprep.mubr.f32.mxu0 0.0
      %705 = vmatmul.mubr.f32.gmra.mxu0 %v359
      %v706 = vpop.f32.mrf.mxu0
      %v707 = vadd.f32 %v256, %v706
      %v708 = vpop.f32.mrf.mxu0
      %709 = vmatprep.mubr.f32.mxu0 0.0
      %710 = vmatmul.mubr.f32.gmra.mxu0 %v362
      %v711 = vpop.f32.mrf.mxu0
      %v712 = vadd.f32 %v256, %v711
      %v713 = vpop.f32.mrf.mxu0
      %714 = vmatprep.mubr.f32.mxu0 0.0
      %715 = vmatmul.mubr.f32.gmra.mxu0 %v365
      %v716 = vpop.f32.mrf.mxu0
      %v717 = vadd.f32 %v256, %v716
      %v718 = vpop.f32.mrf.mxu0
      %719 = vmatprep.mubr.f32.mxu0 0.0
      %720 = vmatmul.mubr.f32.gmra.mxu0 %v368
      %v721 = vpop.f32.mrf.mxu0
      %v722 = vadd.f32 %v256, %v721
      %v723 = vpop.f32.mrf.mxu0
      %724 = vmatprep.mubr.f32.mxu0 0.0
      %725 = vmatmul.mubr.f32.gmra.mxu0 %v371
      %v726 = vpop.f32.mrf.mxu0
      %v727 = vadd.f32 %v256, %v726
      %v728 = vpop.f32.mrf.mxu0
      %729 = vmatprep.mubr.f32.mxu0 0.0
      %730 = vmatmul.mubr.f32.gmra.mxu0 %v374
      %v731 = vpop.f32.mrf.mxu0
      %v732 = vadd.f32 %v256, %v731
      %v733 = vpop.f32.mrf.mxu0
      %734 = vmatprep.mubr.f32.mxu0 0.0
      %735 = vmatmul.mubr.f32.gmra.mxu0 %v377
      %v736 = vpop.f32.mrf.mxu0
      %v737 = vadd.f32 %v256, %v736
      %v738 = vpop.f32.mrf.mxu0
      %739 = vmatprep.mubr.f32.mxu0 0.0
      %740 = vmatmul.mubr.f32.gmra.mxu0 %v380
      %v741 = vpop.f32.mrf.mxu0
      %v742 = vadd.f32 %v256, %v741
      %v743 = vpop.f32.mrf.mxu0
      %744 = vmatprep.mubr.f32.mxu0 0.0
      %745 = vmatmul.mubr.f32.gmra.mxu0 %v383
      %v746 = vpop.f32.mrf.mxu0
      %v747 = vadd.f32 %v256, %v746
      %v748 = vpop.f32.mrf.mxu0
      %749 = vmatprep.mubr.f32.mxu0 0.0
      %750 = vmatmul.mubr.f32.gmra.mxu0 %v386
      %v751 = vpop.f32.mrf.mxu0
      %v752 = vadd.f32 %v256, %v751
      %v753 = vpop.f32.mrf.mxu0
      %754 = vmatprep.mubr.f32.mxu0 0.0
      %755 = vmatmul.mubr.f32.gmra.mxu0 %v389
      %v756 = vpop.f32.mrf.mxu0
      %v757 = vadd.f32 %v256, %v756
      %v758 = vpop.f32.mrf.mxu0
      %759 = vmatprep.mubr.f32.mxu0 0.0
      %760 = vmatmul.mubr.f32.gmra.mxu0 %v392
      %v761 = vpop.f32.mrf.mxu0
      %v762 = vadd.f32 %v256, %v761
      %v763 = vpop.f32.mrf.mxu0
      %764 = vmatprep.mubr.f32.mxu0 0.0
      %765 = vmatmul.mubr.f32.gmra.mxu0 %v395
      %v766 = vpop.f32.mrf.mxu0
      %v767 = vadd.f32 %v256, %v766
      %v768 = vpop.f32.mrf.mxu0
      %769 = vmatprep.mubr.f32.mxu0 0.0
      %770 = vmatmul.mubr.f32.gmra.mxu0 %v398
      %v771 = vpop.f32.mrf.mxu0
      %v772 = vadd.f32 %v256, %v771
      %v773 = vpop.f32.mrf.mxu0
      %774 = vmatprep.mubr.f32.mxu0 0.0
      %775 = vmatmul.mubr.f32.gmra.mxu0 %v401
      %v776 = vpop.f32.mrf.mxu0
      %v777 = vadd.f32 %v256, %v776
      %v778 = vpop.f32.mrf.mxu0
      %779 = vmatprep.mubr.f32.mxu0 0.0
      %780 = vmatmul.mubr.f32.gmra.mxu0 %v404
      %v781 = vpop.f32.mrf.mxu0
      %v782 = vadd.f32 %v256, %v781
      %v783 = vpop.f32.mrf.mxu0
      %784 = vmatprep.mubr.f32.mxu0 0.0
      %785 = vmatmul.mubr.f32.gmra.mxu0 %v407
      %v786 = vpop.f32.mrf.mxu0
      %v787 = vadd.f32 %v256, %v786
      %v788 = vpop.f32.mrf.mxu0
      %789 = vmatprep.mubr.f32.mxu0 0.0
      %790 = vmatmul.mubr.f32.gmra.mxu0 %v410
      %v791 = vpop.f32.mrf.mxu0
      %v792 = vadd.f32 %v256, %v791
      %v793 = vpop.f32.mrf.mxu0
      %794 = vmatprep.mubr.f32.mxu0 0.0
      %795 = vmatmul.mubr.f32.gmra.mxu0 %v413
      %v796 = vpop.f32.mrf.mxu0
      %v797 = vadd.f32 %v256, %v796
      %v798 = vpop.f32.mrf.mxu0
      %799 = vmatprep.mubr.f32.mxu0 0.0
      %800 = vmatmul.mubr.f32.gmra.mxu0 %v416
      %v801 = vpop.f32.mrf.mxu0
      %v802 = vadd.f32 %v256, %v801
      %v803 = vpop.f32.mrf.mxu0
      %804 = vmatprep.mubr.f32.mxu0 0.0
      %805 = vmatmul.mubr.f32.gmra.mxu0 %v419
      %v806 = vpop.f32.mrf.mxu0
      %v807 = vadd.f32 %v256, %v806
      %v808 = vpop.f32.mrf.mxu0
      %809 = vmatprep.mubr.f32.mxu0 0.0
      %810 = vmatmul.mubr.f32.gmra.mxu0 %v422
      %v811 = vpop.f32.mrf.mxu0
      %v812 = vadd.f32 %v256, %v811
      %v813 = vpop.f32.mrf.mxu0
      %814 = vmatprep.mubr.f32.mxu0 0.0
      %815 = vmatmul.mubr.f32.gmra.mxu0 %v425
      %v816 = vpop.f32.mrf.mxu0
      %v817 = vadd.f32 %v256, %v816
      %v818 = vpop.f32.mrf.mxu0
      %819 = vmatprep.mubr.f32.mxu0 0.0
      %820 = vmatmul.mubr.f32.gmra.mxu0 %v428
      %v821 = vpop.f32.mrf.mxu0
      %v822 = vadd.f32 %v256, %v821
      %v823 = vpop.f32.mrf.mxu0
      %824 = vmatprep.mubr.f32.mxu0 0.0
      %825 = vmatmul.mubr.f32.gmra.mxu0 %v431
      %v826 = vpop.f32.mrf.mxu0
      %v827 = vadd.f32 %v256, %v826
      %v828 = vpop.f32.mrf.mxu0
      %829 = vmatprep.mubr.f32.mxu0 0.0
      %830 = vmatmul.mubr.f32.gmra.mxu0 %v434
      %v831 = vpop.f32.mrf.mxu0
      %v832 = vadd.f32 %v256, %v831
      %v833 = vpop.f32.mrf.mxu0
      %834 = vmatprep.mubr.f32.mxu0 0.0
      %835 = vmatmul.mubr.f32.gmra.mxu0 %v437
      %v836 = vpop.f32.mrf.mxu0
      %v837 = vadd.f32 %v256, %v836
      %v838 = vpop.f32.mrf.mxu0
      %839 = vmatprep.mubr.f32.mxu0 0.0
      %840 = vmatmul.mubr.f32.gmra.mxu0 %v440
      %v841 = vpop.f32.mrf.mxu0
      %v842 = vadd.f32 %v256, %v841
      %v843 = vpop.f32.mrf.mxu0
      %844 = vmatprep.mubr.f32.mxu0 0.0
      %845 = vmatmul.mubr.f32.gmra.mxu0 %v443
      %v846 = vpop.f32.mrf.mxu0
      %v847 = vadd.f32 %v256, %v846
      %v848 = vpop.f32.mrf.mxu0
      %849 = vmatprep.mubr.f32.mxu0 0.0
      %850 = vmatmul.mubr.f32.gmra.mxu0 %v446
      %v851 = vpop.f32.mrf.mxu0
      %v852 = vadd.f32 %v256, %v851
      %v853 = vpop.f32.mrf.mxu0
      %854 = vmatprep.mubr.f32.mxu0 0.0
      %855 = vmatmul.mubr.f32.gmra.mxu0 %v449
      %v856 = vpop.f32.mrf.mxu0
      %v857 = vadd.f32 %v256, %v856
      %v858 = vpop.f32.mrf.mxu0
      %859 = vmatprep.mubr.f32.mxu0 0.0
      %860 = vmatmul.mubr.f32.gmra.mxu0 %v452
      %v861 = vpop.f32.mrf.mxu0
      %v862 = vadd.f32 %v256, %v861
      %v863 = vpop.f32.mrf.mxu0
      %864 = vmatprep.mubr.f32.mxu0 0.0
      %865 = vmatmul.mubr.f32.gmra.mxu0 %v455
      %v866 = vpop.f32.mrf.mxu0
      %v867 = vadd.f32 %v256, %v866
      %v868 = vpop.f32.mrf.mxu0
      %869 = vmatprep.mubr.f32.mxu0 0.0
      %870 = vmatmul.mubr.f32.gmra.mxu0 %v458
      %v871 = vpop.f32.mrf.mxu0
      %v872 = vadd.f32 %v256, %v871
      %v873 = vpop.f32.mrf.mxu0
      %874 = vmatprep.mubr.f32.mxu0 0.0
      %875 = vmatmul.mubr.f32.gmra.mxu0 %v461
      %v876 = vpop.f32.mrf.mxu0
      %v877 = vadd.f32 %v256, %v876
      %v878 = vpop.f32.mrf.mxu0
      %879 = vmatprep.mubr.f32.mxu0 0.0
      %880 = vmatmul.mubr.f32.gmra.mxu0 %v464
      %v881 = vpop.f32.mrf.mxu0
      %v882 = vadd.f32 %v256, %v881
      %v883 = vpop.f32.mrf.mxu0
      %884 = vmatprep.mubr.f32.mxu0 0.0
      %885 = vmatmul.mubr.f32.gmra.mxu0 %v467
      %v886 = vpop.f32.mrf.mxu0
      %v887 = vadd.f32 %v256, %v886
      %v888 = vpop.f32.mrf.mxu0
      %889 = vmatprep.mubr.f32.mxu0 0.0
      %890 = vmatmul.mubr.f32.gmra.mxu0 %v470
      %v891 = vpop.f32.mrf.mxu0
      %v892 = vadd.f32 %v256, %v891
      %v893 = vpop.f32.mrf.mxu0
      %894 = vmatprep.mubr.f32.mxu0 0.0
      %895 = vmatmul.mubr.f32.gmra.mxu0 %v473
      %v896 = vpop.f32.mrf.mxu0
      %v897 = vadd.f32 %v256, %v896
      %v898 = vpop.f32.mrf.mxu0
      %899 = vdwg.mxu0
      %v900 = vmax.f32 %v542, 0.0
      %v901 = vmax.f32 %v547, 0.0
      %v902 = vmax.f32 %v552, 0.0
      %v903 = vmax.f32 %v557, 0.0
      %v904 = vmax.f32 %v562, 0.0
      %v905 = vmax.f32 %v567, 0.0
      %v906 = vmax.f32 %v572, 0.0
      %v907 = vmax.f32 %v577, 0.0
      %v908 = vmax.f32 %v582, 0.0
      %v909 = vmax.f32 %v587, 0.0
      %v910 = vmax.f32 %v592, 0.0
      %v911 = vmax.f32 %v597, 0.0
      %v912 = vmax.f32 %v602, 0.0
      %v913 = vmax.f32 %v607, 0.0
      %v914 = vmax.f32 %v612, 0.0
      %v915 = vmax.f32 %v617, 0.0
      %v916 = vmax.f32 %v622, 0.0
      %v917 = vmax.f32 %v627, 0.0
      %v918 = vmax.f32 %v632, 0.0
      %v919 = vmax.f32 %v637, 0.0
      %v920 = vmax.f32 %v642, 0.0
      %v921 = vmax.f32 %v647, 0.0
      %v922 = vmax.f32 %v652, 0.0
      %v923 = vmax.f32 %v657, 0.0
      %v924 = vmax.f32 %v662, 0.0
      %v925 = vmax.f32 %v667, 0.0
      %v926 = vmax.f32 %v672, 0.0
      %v927 = vmax.f32 %v677, 0.0
      %v928 = vmax.f32 %v682, 0.0
      %v929 = vmax.f32 %v687, 0.0
      %v930 = vmax.f32 %v692, 0.0
      %v931 = vmax.f32 %v697, 0.0
      %v932 = vmax.f32 %v702, 0.0
      %v933 = vmax.f32 %v707, 0.0
      %v934 = vmax.f32 %v712, 0.0
      %v935 = vmax.f32 %v717, 0.0
      %v936 = vmax.f32 %v722, 0.0
      %v937 = vmax.f32 %v727, 0.0
      %v938 = vmax.f32 %v732, 0.0
      %v939 = vmax.f32 %v737, 0.0
      %v940 = vmax.f32 %v742, 0.0
      %v941 = vmax.f32 %v747, 0.0
      %v942 = vmax.f32 %v752, 0.0
      %v943 = vmax.f32 %v757, 0.0
      %v944 = vmax.f32 %v762, 0.0
      %v945 = vmax.f32 %v767, 0.0
      %v946 = vmax.f32 %v772, 0.0
      %v947 = vmax.f32 %v777, 0.0
      %v948 = vmax.f32 %v782, 0.0
      %v949 = vmax.f32 %v787, 0.0
      %v950 = vmax.f32 %v792, 0.0
      %v951 = vmax.f32 %v797, 0.0
      %v952 = vmax.f32 %v802, 0.0
      %v953 = vmax.f32 %v807, 0.0
      %v954 = vmax.f32 %v812, 0.0
      %v955 = vmax.f32 %v817, 0.0
      %v956 = vmax.f32 %v822, 0.0
      %v957 = vmax.f32 %v827, 0.0
      %v958 = vmax.f32 %v832, 0.0
      %v959 = vmax.f32 %v837, 0.0
      %v960 = vmax.f32 %v842, 0.0
      %v961 = vmax.f32 %v847, 0.0
      %v962 = vmax.f32 %v852, 0.0
      %v963 = vmax.f32 %v857, 0.0
      %v964 = vmax.f32 %v862, 0.0
      %v965 = vmax.f32 %v867, 0.0
      %v966 = vmax.f32 %v872, 0.0
      %v967 = vmax.f32 %v877, 0.0
      %v968 = vmax.f32 %v882, 0.0
      %v969 = vmax.f32 %v887, 0.0
      %v970 = vmax.f32 %v892, 0.0
      %v971 = vmax.f32 %v897, 0.0
      %vm972 = vcmask 130048
      %v973 = vsel %vm972, %v900, -inf
      %v974 = vsel %vm972, %v901, -inf
      %v975 = vmax.f32 %v973, %v974
      %v976 = vsel %vm972, %v902, -inf
      %v977 = vmax.f32 %v975, %v976
      %v978 = vrot.slane %v977, 4
      %v979 = vmax.f32 %v977, %v978
      %v980 = vrot.slane %v979, 2
      %v981 = vmax.f32 %v979, %v980
      %v982 = vrot.slane %v981, 1
      %v983 = vmax.f32 %v981, %v982
      %v984 = vsel %vm972, %v903, -inf
      %v985 = vsel %vm972, %v904, -inf
      %v986 = vmax.f32 %v984, %v985
      %v987 = vsel %vm972, %v905, -inf
      %v988 = vmax.f32 %v986, %v987
      %v989 = vrot.slane %v988, 4
      %v990 = vmax.f32 %v988, %v989
      %v991 = vrot.slane %v990, 2
      %v992 = vmax.f32 %v990, %v991
      %v993 = vrot.slane %v992, 1
      %v994 = vmax.f32 %v992, %v993
      %v995 = vsel %vm972, %v906, -inf
      %v996 = vsel %vm972, %v907, -inf
      %v997 = vmax.f32 %v995, %v996
      %v998 = vsel %vm972, %v908, -inf
      %v999 = vmax.f32 %v997, %v998
      %v1000 = vrot.slane %v999, 4
      %v1001 = vmax.f32 %v999, %v1000
      %v1002 = vrot.slane %v1001, 2
      %v1003 = vmax.f32 %v1001, %v1002
      %v1004 = vrot.slane %v1003, 1
      %v1005 = vmax.f32 %v1003, %v1004
      %v1006 = vsel %vm972, %v909, -inf
      %v1007 = vsel %vm972, %v910, -inf
      %v1008 = vmax.f32 %v1006, %v1007
      %v1009 = vsel %vm972, %v911, -inf
      %v1010 = vmax.f32 %v1008, %v1009
      %v1011 = vrot.slane %v1010, 4
      %v1012 = vmax.f32 %v1010, %v1011
      %v1013 = vrot.slane %v1012, 2
      %v1014 = vmax.f32 %v1012, %v1013
      %v1015 = vrot.slane %v1014, 1
      %v1016 = vmax.f32 %v1014, %v1015
      %v1017 = vsel %vm972, %v912, -inf
      %v1018 = vsel %vm972, %v913, -inf
      %v1019 = vmax.f32 %v1017, %v1018
      %v1020 = vsel %vm972, %v914, -inf
      %v1021 = vmax.f32 %v1019, %v1020
      %v1022 = vrot.slane %v1021, 4
      %v1023 = vmax.f32 %v1021, %v1022
      %v1024 = vrot.slane %v1023, 2
      %v1025 = vmax.f32 %v1023, %v1024
      %v1026 = vrot.slane %v1025, 1
      %v1027 = vmax.f32 %v1025, %v1026
      %v1028 = vsel %vm972, %v915, -inf
      %v1029 = vsel %vm972, %v916, -inf
      %v1030 = vmax.f32 %v1028, %v1029
      %v1031 = vsel %vm972, %v917, -inf
      %v1032 = vmax.f32 %v1030, %v1031
      %v1033 = vrot.slane %v1032, 4
      %v1034 = vmax.f32 %v1032, %v1033
      %v1035 = vrot.slane %v1034, 2
      %v1036 = vmax.f32 %v1034, %v1035
      %v1037 = vrot.slane %v1036, 1
      %v1038 = vmax.f32 %v1036, %v1037
      %v1039 = vsel %vm972, %v918, -inf
      %v1040 = vsel %vm972, %v919, -inf
      %v1041 = vmax.f32 %v1039, %v1040
      %v1042 = vsel %vm972, %v920, -inf
      %v1043 = vmax.f32 %v1041, %v1042
      %v1044 = vrot.slane %v1043, 4
      %v1045 = vmax.f32 %v1043, %v1044
      %v1046 = vrot.slane %v1045, 2
      %v1047 = vmax.f32 %v1045, %v1046
      %v1048 = vrot.slane %v1047, 1
      %v1049 = vmax.f32 %v1047, %v1048
      %v1050 = vsel %vm972, %v921, -inf
      %v1051 = vsel %vm972, %v922, -inf
      %v1052 = vmax.f32 %v1050, %v1051
      %v1053 = vsel %vm972, %v923, -inf
      %v1054 = vmax.f32 %v1052, %v1053
      %v1055 = vrot.slane %v1054, 4
      %v1056 = vmax.f32 %v1054, %v1055
      %v1057 = vrot.slane %v1056, 2
      %v1058 = vmax.f32 %v1056, %v1057
      %v1059 = vrot.slane %v1058, 1
      %v1060 = vmax.f32 %v1058, %v1059
      %v1061 = vsel %vm972, %v924, -inf
      %v1062 = vsel %vm972, %v925, -inf
      %v1063 = vmax.f32 %v1061, %v1062
      %v1064 = vsel %vm972, %v926, -inf
      %v1065 = vmax.f32 %v1063, %v1064
      %v1066 = vrot.slane %v1065, 4
      %v1067 = vmax.f32 %v1065, %v1066
      %v1068 = vrot.slane %v1067, 2
      %v1069 = vmax.f32 %v1067, %v1068
      %v1070 = vrot.slane %v1069, 1
      %v1071 = vmax.f32 %v1069, %v1070
      %v1072 = vsel %vm972, %v927, -inf
      %v1073 = vsel %vm972, %v928, -inf
      %v1074 = vmax.f32 %v1072, %v1073
      %v1075 = vsel %vm972, %v929, -inf
      %v1076 = vmax.f32 %v1074, %v1075
      %v1077 = vrot.slane %v1076, 4
      %v1078 = vmax.f32 %v1076, %v1077
      %v1079 = vrot.slane %v1078, 2
      %v1080 = vmax.f32 %v1078, %v1079
      %v1081 = vrot.slane %v1080, 1
      %v1082 = vmax.f32 %v1080, %v1081
      %v1083 = vsel %vm972, %v930, -inf
      %v1084 = vsel %vm972, %v931, -inf
      %v1085 = vmax.f32 %v1083, %v1084
      %v1086 = vsel %vm972, %v932, -inf
      %v1087 = vmax.f32 %v1085, %v1086
      %v1088 = vrot.slane %v1087, 4
      %v1089 = vmax.f32 %v1087, %v1088
      %v1090 = vrot.slane %v1089, 2
      %v1091 = vmax.f32 %v1089, %v1090
      %v1092 = vrot.slane %v1091, 1
      %v1093 = vmax.f32 %v1091, %v1092
      %v1094 = vsel %vm972, %v933, -inf
      %v1095 = vsel %vm972, %v934, -inf
      %v1096 = vmax.f32 %v1094, %v1095
      %v1097 = vsel %vm972, %v935, -inf
      %v1098 = vmax.f32 %v1096, %v1097
      %v1099 = vrot.slane %v1098, 4
      %v1100 = vmax.f32 %v1098, %v1099
      %v1101 = vrot.slane %v1100, 2
      %v1102 = vmax.f32 %v1100, %v1101
      %v1103 = vrot.slane %v1102, 1
      %v1104 = vmax.f32 %v1102, %v1103
      %v1105 = vsel %vm972, %v936, -inf
      %v1106 = vsel %vm972, %v937, -inf
      %v1107 = vmax.f32 %v1105, %v1106
      %v1108 = vsel %vm972, %v938, -inf
      %v1109 = vmax.f32 %v1107, %v1108
      %v1110 = vrot.slane %v1109, 4
      %v1111 = vmax.f32 %v1109, %v1110
      %v1112 = vrot.slane %v1111, 2
      %v1113 = vmax.f32 %v1111, %v1112
      %v1114 = vrot.slane %v1113, 1
      %v1115 = vmax.f32 %v1113, %v1114
      %v1116 = vsel %vm972, %v939, -inf
      %v1117 = vsel %vm972, %v940, -inf
      %v1118 = vmax.f32 %v1116, %v1117
      %v1119 = vsel %vm972, %v941, -inf
      %v1120 = vmax.f32 %v1118, %v1119
      %v1121 = vrot.slane %v1120, 4
      %v1122 = vmax.f32 %v1120, %v1121
      %v1123 = vrot.slane %v1122, 2
      %v1124 = vmax.f32 %v1122, %v1123
      %v1125 = vrot.slane %v1124, 1
      %v1126 = vmax.f32 %v1124, %v1125
      %v1127 = vsel %vm972, %v942, -inf
      %v1128 = vsel %vm972, %v943, -inf
      %v1129 = vmax.f32 %v1127, %v1128
      %v1130 = vsel %vm972, %v944, -inf
      %v1131 = vmax.f32 %v1129, %v1130
      %v1132 = vrot.slane %v1131, 4
      %v1133 = vmax.f32 %v1131, %v1132
      %v1134 = vrot.slane %v1133, 2
      %v1135 = vmax.f32 %v1133, %v1134
      %v1136 = vrot.slane %v1135, 1
      %v1137 = vmax.f32 %v1135, %v1136
      %v1138 = vsel %vm972, %v945, -inf
      %v1139 = vsel %vm972, %v946, -inf
      %v1140 = vmax.f32 %v1138, %v1139
      %v1141 = vsel %vm972, %v947, -inf
      %v1142 = vmax.f32 %v1140, %v1141
      %v1143 = vrot.slane %v1142, 4
      %v1144 = vmax.f32 %v1142, %v1143
      %v1145 = vrot.slane %v1144, 2
      %v1146 = vmax.f32 %v1144, %v1145
      %v1147 = vrot.slane %v1146, 1
      %v1148 = vmax.f32 %v1146, %v1147
      %v1149 = vsel %vm972, %v948, -inf
      %v1150 = vsel %vm972, %v949, -inf
      %v1151 = vmax.f32 %v1149, %v1150
      %v1152 = vsel %vm972, %v950, -inf
      %v1153 = vmax.f32 %v1151, %v1152
      %v1154 = vrot.slane %v1153, 4
      %v1155 = vmax.f32 %v1153, %v1154
      %v1156 = vrot.slane %v1155, 2
      %v1157 = vmax.f32 %v1155, %v1156
      %v1158 = vrot.slane %v1157, 1
      %v1159 = vmax.f32 %v1157, %v1158
      %v1160 = vsel %vm972, %v951, -inf
      %v1161 = vsel %vm972, %v952, -inf
      %v1162 = vmax.f32 %v1160, %v1161
      %v1163 = vsel %vm972, %v953, -inf
      %v1164 = vmax.f32 %v1162, %v1163
      %v1165 = vrot.slane %v1164, 4
      %v1166 = vmax.f32 %v1164, %v1165
      %v1167 = vrot.slane %v1166, 2
      %v1168 = vmax.f32 %v1166, %v1167
      %v1169 = vrot.slane %v1168, 1
      %v1170 = vmax.f32 %v1168, %v1169
      %v1171 = vsel %vm972, %v954, -inf
      %v1172 = vsel %vm972, %v955, -inf
      %v1173 = vmax.f32 %v1171, %v1172
      %v1174 = vsel %vm972, %v956, -inf
      %v1175 = vmax.f32 %v1173, %v1174
      %v1176 = vrot.slane %v1175, 4
      %v1177 = vmax.f32 %v1175, %v1176
      %v1178 = vrot.slane %v1177, 2
      %v1179 = vmax.f32 %v1177, %v1178
      %v1180 = vrot.slane %v1179, 1
      %v1181 = vmax.f32 %v1179, %v1180
      %v1182 = vsel %vm972, %v957, -inf
      %v1183 = vsel %vm972, %v958, -inf
      %v1184 = vmax.f32 %v1182, %v1183
      %v1185 = vsel %vm972, %v959, -inf
      %v1186 = vmax.f32 %v1184, %v1185
      %v1187 = vrot.slane %v1186, 4
      %v1188 = vmax.f32 %v1186, %v1187
      %v1189 = vrot.slane %v1188, 2
      %v1190 = vmax.f32 %v1188, %v1189
      %v1191 = vrot.slane %v1190, 1
      %v1192 = vmax.f32 %v1190, %v1191
      %v1193 = vsel %vm972, %v960, -inf
      %v1194 = vsel %vm972, %v961, -inf
      %v1195 = vmax.f32 %v1193, %v1194
      %v1196 = vsel %vm972, %v962, -inf
      %v1197 = vmax.f32 %v1195, %v1196
      %v1198 = vrot.slane %v1197, 4
      %v1199 = vmax.f32 %v1197, %v1198
      %v1200 = vrot.slane %v1199, 2
      %v1201 = vmax.f32 %v1199, %v1200
      %v1202 = vrot.slane %v1201, 1
      %v1203 = vmax.f32 %v1201, %v1202
      %v1204 = vsel %vm972, %v963, -inf
      %v1205 = vsel %vm972, %v964, -inf
      %v1206 = vmax.f32 %v1204, %v1205
      %v1207 = vsel %vm972, %v965, -inf
      %v1208 = vmax.f32 %v1206, %v1207
      %v1209 = vrot.slane %v1208, 4
      %v1210 = vmax.f32 %v1208, %v1209
      %v1211 = vrot.slane %v1210, 2
      %v1212 = vmax.f32 %v1210, %v1211
      %v1213 = vrot.slane %v1212, 1
      %v1214 = vmax.f32 %v1212, %v1213
      %v1215 = vsel %vm972, %v966, -inf
      %v1216 = vsel %vm972, %v967, -inf
      %v1217 = vmax.f32 %v1215, %v1216
      %v1218 = vsel %vm972, %v968, -inf
      %v1219 = vmax.f32 %v1217, %v1218
      %v1220 = vrot.slane %v1219, 4
      %v1221 = vmax.f32 %v1219, %v1220
      %v1222 = vrot.slane %v1221, 2
      %v1223 = vmax.f32 %v1221, %v1222
      %v1224 = vrot.slane %v1223, 1
      %v1225 = vmax.f32 %v1223, %v1224
      %v1226 = vsel %vm972, %v969, -inf
      %v1227 = vsel %vm972, %v970, -inf
      %v1228 = vmax.f32 %v1226, %v1227
      %v1229 = vsel %vm972, %v971, -inf
      %v1230 = vmax.f32 %v1228, %v1229
      %v1231 = vrot.slane %v1230, 4
      %v1232 = vmax.f32 %v1230, %v1231
      %v1233 = vrot.slane %v1232, 2
      %v1234 = vmax.f32 %v1232, %v1233
      %v1235 = vrot.slane %v1234, 1
      %v1236 = vmax.f32 %v1234, %v1235
      %vm1261 = vcmask 1041409
      %v1262 = vsel %vm1261, %v994, %v983
      %vm1263 = vcmask 1042434
      %v1264 = vsel %vm1263, %v1005, %v1262
      %vm1265 = vcmask 1043459
      %v1266 = vsel %vm1265, %v1016, %v1264
      %vm1267 = vcmask 1044484
      %v1268 = vsel %vm1267, %v1027, %v1266
      %vm1269 = vcmask 1045509
      %v1270 = vsel %vm1269, %v1038, %v1268
      %vm1271 = vcmask 1046534
      %v1272 = vsel %vm1271, %v1049, %v1270
      %vm1273 = vcmask 1047559
      %v1274 = vsel %vm1273, %v1060, %v1272
      %v1275 = vsel %vm1261, %v1082, %v1071
      %v1276 = vsel %vm1263, %v1093, %v1275
      %v1277 = vsel %vm1265, %v1104, %v1276
      %v1278 = vsel %vm1267, %v1115, %v1277
      %v1279 = vsel %vm1269, %v1126, %v1278
      %v1280 = vsel %vm1271, %v1137, %v1279
      %v1281 = vsel %vm1273, %v1148, %v1280
      %v1282 = vsel %vm1261, %v1170, %v1159
      %v1283 = vsel %vm1263, %v1181, %v1282
      %v1284 = vsel %vm1265, %v1192, %v1283
      %v1285 = vsel %vm1267, %v1203, %v1284
      %v1286 = vsel %vm1269, %v1214, %v1285
      %v1287 = vsel %vm1271, %v1225, %v1286
      %v1288 = vsel %vm1273, %v1236, %v1287
      %1292 = vst.msk [vmem:[%s172] sm:$0xff] %vm972, %v1274
      %1293 = vst.msk [vmem:[%s172 + $0x8] sm:$0xff] %vm972, %v1281
      %1294 = vst.msk [vmem:[%s172 + $0x10] sm:$0xff] %vm972, %v1288
      %s1295 = smul.u32 3, %s14
      %p1296 = scmp.lt.s32.totalorder %s1295, 8
      %s1297 = scalar_select %p1296, %s1295, 8
      %s1298 = smul.addr %s1297, 8
      %s1299 = scalar_lea.vmem %s3, %s1298
      // Predicated region
      $region33: #{cnn_forward.1} parent=31 // pred_check
        %p1300 = pneg %p100
      $region34: #{cnn_forward.1} parent=31 // pred_check_branch
        %1302 = sbr.rel (%p1300) target = $region36
      $region35: #{cnn_forward.1} parent=31 // pred_region
        %s1303 = smul.u32 3, %s14
      $region36: #{cnn_forward.1} parent=31 // pred_fallthru
        _
    $region32: #{cnn_forward.1} parent=5 // pred_fallthru
      _
    %p1304 = scmp.le.s32.totalorder 2, %s9
    // Predicated region
    $region37: #{cnn_forward.1} parent=5 // pred_check
      %p1305 = pneg %p1304
    $region38: #{cnn_forward.1} parent=5 // pred_check_branch
      %1307 = sbr.rel (%p1305) target = $region40
    $region39: #{cnn_forward.1} parent=5 // pred_region
      %s1308 = ssub.s32 %s9, 2
      // Predicated region
      $region41: #{cnn_forward.1} parent=39 // pred_check
        %p1309 = pneg %p106
      $region42: #{cnn_forward.1} parent=39 // pred_check_branch
        %1311 = sbr.rel (%p1309) target = $region44
      $region43: #{cnn_forward.1} parent=39 // pred_region
        %s1312 = smul.u32 3, %s15
        %p1313 = scmp.lt.s32.totalorder %s1312, 8
        %s1314 = scalar_select %p1313, %s1312, 8
        %s1315 = smul.addr %s1314, 8
        %s1316 = scalar_lea.vmem %s3, %s1315
      $region44: #{cnn_forward.1} parent=39 // pred_fallthru
        _
    $region40: #{cnn_forward.1} parent=5 // pred_fallthru
      _
  $region6: #{cnn_forward.1} parent=0 // loop_footer
    %s13 = sadd.s32 1, %s9
  $region7: #{cnn_forward.1} parent=0 // loop_footer_branch
    %8 = sbr.rel target = $region3
  $region8: #{cnn_forward.1} parent=0 // loop_exit
    _

</llo_original>
